<compile_context>
chip_gen: v6e
topology: v6e:2x2x1
jax: 0.10.0
libtpu: 0.0.40
codegen_flags: <defaults>
</compile_context>

<pallas_src>
import jax
import jax.numpy as jnp
from jax import lax
from jax.experimental import pallas as pl
from jax.experimental.pallas import tpu as pltpu


def _round_up(x: int, m: int) -> int:
    return (x + m - 1) // m * m


# ---------------------------------------------------------------------------
# Kernels
# ---------------------------------------------------------------------------
def _sum_pool_kernel(w_ref, emb_ref, o_ref, acc_ref):
    """sum_c w[b, c] * emb[c, d]  ==  w @ emb on the MXU, tiled over (B, D, C)."""
    k = pl.program_id(2)

    @pl.when(k == 0)
    def _init():
        acc_ref[...] = jnp.zeros(acc_ref.shape, jnp.float32)

    acc_ref[...] += jnp.dot(
        w_ref[...], emb_ref[...], preferred_element_type=jnp.float32
    )

    @pl.when(k == pl.num_programs(2) - 1)
    def _store():
        o_ref[...] = acc_ref[...].astype(o_ref.dtype)


def _make_max_pool_kernel(num_valid_c: int, bk: int, needs_mask: bool, ck: int = 8):
    """max_c w[b, c] * emb[c, d] as a chunked running max (no [B,C,D] intermediate)."""

    def kernel(w_ref, emb_ref, o_ref, acc_ref):
        k = pl.program_id(2)

        @pl.when(k == 0)
        def _init():
            acc_ref[...] = jnp.full(acc_ref.shape, -jnp.inf, jnp.float32)

        # Load tiles once; compute in f32 (VPU-friendly on all generations).
        w = w_ref[...].astype(jnp.float32)      # [bm, bk]
        emb = emb_ref[...].astype(jnp.float32)  # [bk, bn]
        base = k * bk

        acc = acc_ref[...]
        for c0 in range(0, bk, ck):             # small fully-unrolled inner loop
            wc = w[:, c0:c0 + ck]               # [bm, ck]   (static slices: free)
            ec = emb[c0:c0 + ck, :]             # [ck, bn]
            prod = wc[:, :, None] * ec[None, :, :]          # [bm, ck, bn]
            if needs_mask:
                cat_idx = base + c0 + lax.broadcasted_iota(jnp.int32, prod.shape, 1)
                prod = jnp.where(cat_idx < num_valid_c, prod, -jnp.inf)
            acc = jnp.maximum(acc, jnp.max(prod, axis=1))   # [bm, bn]
        acc_ref[...] = acc

        @pl.when(k == pl.num_programs(2) - 1)
        def _store():
            o_ref[...] = acc_ref[...].astype(o_ref.dtype)

    return kernel


# ---------------------------------------------------------------------------
# Wrapper
# ---------------------------------------------------------------------------
def weighted_embedding_encoder(weights, emb_table, pooling="sum"):
    """weights: [B, C] float, emb_table: [C, D] float -> [B, D] float32."""
    B, C = weights.shape
    C2, D = emb_table.shape
    assert C == C2, "num_categories mismatch between weights and embedding table"

    if pooling == "sum":
        # MXU path: large lane-dense tiles; bf16 streaming + f32 accumulation.
        bm = min(256, _round_up(B, 8))
        bk = min(512, _round_up(C, 128))
        bn = min(512, _round_up(D, 128))
        kernel = _sum_pool_kernel
    elif pooling == "max":
        # VPU path: moderate tiles keep the [bm, ck, bn] chunk vreg-friendly.
        bm = min(64, _round_up(B, 8))
        bk = min(128, _round_up(C, 128))
        bn = min(256, _round_up(D, 128))
        kernel = None  # built below once padding is known
    else:
        raise ValueError(f"unsupported pooling: {pooling!r}")

    Bp = _round_up(B, bm)
    Cp = _round_up(C, bk)
    Dp = _round_up(D, bn)

    if pooling == "max":
        kernel = _make_max_pool_kernel(num_valid_c=C, bk=bk, needs_mask=(Cp != C))

    # bf16 streaming: halves HBM bytes for the (dominant) table read. Zero padding
    # is harmless for sum (0 contribution) and explicitly masked for max.
    w_p = jnp.zeros((Bp, Cp), jnp.bfloat16).at[:B, :C].set(
        weights.astype(jnp.bfloat16))
    e_p = jnp.zeros((Cp, Dp), jnp.bfloat16).at[:C, :D].set(
        emb_table.astype(jnp.bfloat16))

    grid = (Bp // bm, Dp // bn, Cp // bk)

    out = pl.pallas_call(
        kernel,
        out_shape=jax.ShapeDtypeStruct((Bp, Dp), jnp.float32),
        grid_spec=pl.GridSpec(
            grid=grid,
            in_specs=[
                pl.BlockSpec((bm, bk), lambda i, j, k: (i, k)),
                pl.BlockSpec((bk, bn), lambda i, j, k: (k, j)),
            ],
            out_specs=pl.BlockSpec((bm, bn), lambda i, j, k: (i, j)),
            scratch_shapes=[pltpu.VMEM((bm, bn), jnp.float32)],
        ),
        compiler_params=pltpu.CompilerParams(
            dimension_semantics=("parallel", "parallel", "arbitrary"),
            vmem_limit_bytes=32 * 1024 * 1024,
        ),
    )(w_p, e_p)

    return out[:B, :D]


# ---------------------------------------------------------------------------
# Main
# ---------------------------------------------------------------------------
if __name__ == "__main__":
    def reference(weights, emb_table):
        # Exact PyTorch semantics on the same bf16-cast operands the kernel sees.
        w32 = weights.astype(jnp.bfloat16).astype(jnp.float32)
        e32 = emb_table.astype(jnp.bfloat16).astype(jnp.float32)
        weighted = e32[None, :, :] * w32[:, :, None]      # [B, C, D]
        return jnp.sum(weighted, axis=1), jnp.max(weighted, axis=1)

    key = jax.random.PRNGKey(0)

    # --- Test 1: module-sized shapes (single grid step) --------------------
    batch_size, num_categories, embedding_dim = 2, 8, 32
    k_emb, k_w, key = jax.random.split(key, 3)
    emb_table = jax.random.normal(k_emb, (num_categories, embedding_dim), jnp.float32)
    weights = jax.random.uniform(k_w, (batch_size, num_categories), jnp.float32)

    out_sum = jax.block_until_ready(
        weighted_embedding_encoder(weights, emb_table, pooling="sum"))
    out_max = jax.block_until_ready(
        weighted_embedding_encoder(weights, emb_table, pooling="max"))

    ref_sum, ref_max = reference(weights, emb_table)
    assert out_sum.shape == (batch_size, embedding_dim)
    assert out_max.shape == (batch_size, embedding_dim)
    assert jnp.allclose(out_sum, ref_sum, atol=1e-3, rtol=1e-3)
    assert jnp.allclose(out_max, ref_max, atol=1e-3, rtol=1e-3)

    # --- Test 2: non-aligned shapes exercising the multi-step reduction ----
    B2, C2, D2 = 4, 300, 160   # C, D not multiples of 128 -> padded + masked tail
    k_emb2, k_w2, key = jax.random.split(key, 3)
    emb_table2 = jax.random.normal(k_emb2, (C2, D2), jnp.float32)
    weights2 = jax.random.uniform(k_w2, (B2, C2), jnp.float32)

    out_sum2 = jax.block_until_ready(
        weighted_embedding_encoder(weights2, emb_table2, pooling="sum"))
    out_max2 = jax.block_until_ready(
        weighted_embedding_encoder(weights2, emb_table2, pooling="max"))

    ref_sum2, ref_max2 = reference(weights2, emb_table2)
    assert out_sum2.shape == (B2, D2)
    assert out_max2.shape == (B2, D2)
    assert jnp.allclose(out_sum2, ref_sum2, atol=1e-3, rtol=1e-3)
    assert jnp.allclose(out_max2, ref_max2, atol=1e-3, rtol=1e-3)

    print("KERNEL_OK")
</pallas_src>

<mosaic_0001>
module attributes {stable_mosaic.version = 11 : i64} {
  func.func @_sum_pool_kernel(%arg0: i32, %arg1: i32, %arg2: i32, %arg3: memref<8x128xbf16, #tpu.memory_space<vmem>>, %arg4: memref<128x128xbf16, #tpu.memory_space<vmem>>, %arg5: memref<8x128xf32, #tpu.memory_space<vmem>>, %arg6: memref<8x128xf32, #tpu.memory_space<vmem>>) attributes {dimension_semantics = [#tpu.dimension_semantics<parallel>, #tpu.dimension_semantics<parallel>, #tpu.dimension_semantics<arbitrary>], iteration_bounds = array<i64: 1, 1, 1>, scalar_prefetch = 0 : i64, scratch_operands = 1 : i64, tpu.core_type = #tpu.core_type<tc>, window_params = [{transform_indices = @transform_0, window_bounds = array<i64: 8, 128>}, {transform_indices = @transform_1, window_bounds = array<i64: 128, 128>}, {transform_indices = @transform_2, window_bounds = array<i64: 8, 128>}]} {
    %c0_i32 = arith.constant 0 : i32
    %0 = arith.cmpi eq, %arg2, %c0_i32 : i32
    %1 = arith.extui %0 : i1 to i32
    %c0_i32_0 = arith.constant 0 : i32
    %2 = arith.cmpi ne, %1, %c0_i32_0 : i32
    scf.if %2 {
      %cst_10 = arith.constant 0.000000e+00 : f32
      %12 = vector.broadcast %cst_10 : f32 to vector<8x128xf32>
      %c0_11 = arith.constant 0 : index
      %c0_12 = arith.constant 0 : index
      %13 = vector.load %arg6[%c0_11, %c0_12] : memref<8x128xf32, #tpu.memory_space<vmem>>, vector<8x128xf32>
      tpu.vector_store %arg6[%c0_11, %c0_12], %12 {strides = array<i32>} : memref<8x128xf32, #tpu.memory_space<vmem>>, vector<8x128xf32>,
    } else {
    }
    %c0 = arith.constant 0 : index
    %c0_1 = arith.constant 0 : index
    %3 = vector.load %arg6[%c0, %c0_1] : memref<8x128xf32, #tpu.memory_space<vmem>>, vector<8x128xf32>
    %c0_2 = arith.constant 0 : index
    %c0_3 = arith.constant 0 : index
    %4 = vector.load %arg3[%c0_2, %c0_3] : memref<8x128xbf16, #tpu.memory_space<vmem>>, vector<8x128xbf16>
    %c0_4 = arith.constant 0 : index
    %c0_5 = arith.constant 0 : index
    %5 = vector.load %arg4[%c0_4, %c0_5] : memref<128x128xbf16, #tpu.memory_space<vmem>>, vector<128x128xbf16>
    %cst = arith.constant dense<0.000000e+00> : vector<8x128xf32>
    %6 = tpu.matmul %4, %5, %cst {dimension_numbers = #tpu.dot_dimension_numbers<[1], [0], [0], [1], [0, 0, 1, 1], [], []>} : vector<8x128xbf16>, vector<128x128xbf16>, vector<8x128xf32> -> vector<8x128xf32>
    %7 = arith.addf %3, %6 : vector<8x128xf32>
    %c0_6 = arith.constant 0 : index
    %c0_7 = arith.constant 0 : index
    %8 = vector.load %arg6[%c0_6, %c0_7] : memref<8x128xf32, #tpu.memory_space<vmem>>, vector<8x128xf32>
    tpu.vector_store %arg6[%c0_6, %c0_7], %7 {strides = array<i32>} : memref<8x128xf32, #tpu.memory_space<vmem>>, vector<8x128xf32>,
    %c0_i32_8 = arith.constant 0 : i32
    %9 = arith.cmpi eq, %arg2, %c0_i32_8 : i32
    %10 = arith.extui %9 : i1 to i32
    %c0_i32_9 = arith.constant 0 : i32
    %11 = arith.cmpi ne, %10, %c0_i32_9 : i32
    scf.if %11 {
      %c0_10 = arith.constant 0 : index
      %c0_11 = arith.constant 0 : index
      %12 = vector.load %arg6[%c0_10, %c0_11] : memref<8x128xf32, #tpu.memory_space<vmem>>, vector<8x128xf32>
      %c0_12 = arith.constant 0 : index
      %c0_13 = arith.constant 0 : index
      %13 = vector.load %arg5[%c0_12, %c0_13] : memref<8x128xf32, #tpu.memory_space<vmem>>, vector<8x128xf32>
      tpu.vector_store %arg5[%c0_12, %c0_13], %12 {strides = array<i32>} : memref<8x128xf32, #tpu.memory_space<vmem>>, vector<8x128xf32>,
    } else {
    }
    return
  }
  func.func @transform_0(%arg0: i32, %arg1: i32, %arg2: i32) -> (i32, i32) {
    %c0_i32 = arith.constant 0 : i32
    return %arg0, %arg2 : i32, i32
  }
  func.func @transform_1(%arg0: i32, %arg1: i32, %arg2: i32) -> (i32, i32) {
    %c0_i32 = arith.constant 0 : i32
    return %arg2, %arg1 : i32, i32
  }
  func.func @transform_2(%arg0: i32, %arg1: i32, %arg2: i32) -> (i32, i32) {
    %c0_i32 = arith.constant 0 : i32
    return %arg0, %arg1 : i32, i32
  }
}

</mosaic_0001>

<llo_original>
// kernel: tpu_custom_call.1
$region0: #{tpu_custom_call.1}
  #allocation0 [shape = 'u32[]', space=smem, size = 0x4, offset = 0x4, fixed_abs, tag = 'smem constant byte address 0x4 - core index']
  #allocation1 [shape = 'u32[144,128]{1,0:T(1,128)}', space=vmem, size = 0x12000, scoped, tag = 'internal scratch']
  #allocation2 [shape = 'f32[8,128]{1,0:T(8,128)}', space=vmem, size = 0x1000, scoped, tag = 'scratch operand']
  %s0 = inlined_call_operand.hbm [shape: bf16[8,128], index: 0, kind: input, shape index: {}]
  %s1 = inlined_call_operand.hbm [shape: bf16[128,128], index: 1, kind: input, shape index: {}]
  %s2 = inlined_call_operand.hbm [shape: f32[8,128], index: 2, kind: output, shape index: {}]
  %s3 = sld [smem:[#allocation0]]
  $region34: #{tpu_custom_call.1} parent=0
    _
  %s5 = ssub.s32 1, %s3
  %s6 = scalar_select 0, %s5, %s3
  $region1: #{tpu_custom_call.1} parent=0
    #allocation3 [shape = 'u8[2048]{0}', space=vmem, size = 0x800, scoped, tag = 'input window, operand 0, single buffered']
    #allocation4 [shape = 's32[1]{0}', space=sflag, size = 0x4, scoped, tag = 'scoped memory for tpu_custom_call.1']
    #allocation5 [shape = 's32[1]{0}', space=sflag, size = 0x4, scoped, tag = 'scoped memory for tpu_custom_call.1']
    #allocation6 [shape = 'u8[32768]{0}', space=vmem, size = 0x8000, scoped, tag = 'input window, operand 1, single buffered']
    #allocation7 [shape = 's32[1]{0}', space=sflag, size = 0x4, scoped, tag = 'scoped memory for tpu_custom_call.1']
    #allocation8 [shape = 'u8[4096]{0}', space=vmem, size = 0x1000, scoped, tag = 'output window, operand 0, single buffered']
    %7 = vsyncpa [#allocation4], 0
    %8 = vsyncpa [#allocation7], 0
    %9 = vsyncpa [#allocation5], 0
    // Predicated region
    $region2: #{tpu_custom_call.1} parent=1 // pred_check
      _
    $region3: #{tpu_custom_call.1} parent=1 // pred_check_branch
      %11 = sbr.rel (0) target = $region5
    $region4: #{tpu_custom_call.1} parent=1 // pred_region
      %s13 = ssub.s32 64, 64
      %14 = vsyncadd [#allocation4], %s13
      %s16 = sshll.u32 [#allocation3], 4
      %s17 = int_to_ptr.vmem [resolvable:$true] %s16
      %19 = dma.hbm_to_vmem [thread:$0]  %s0, 64, %s17, [#allocation4]
    $region5: #{tpu_custom_call.1} parent=1 // pred_fallthru
      _
    // Predicated region
    $region6: #{tpu_custom_call.1} parent=1 // pred_check
      _
    $region7: #{tpu_custom_call.1} parent=1 // pred_check_branch
      %21 = sbr.rel (0) target = $region9
    $region8: #{tpu_custom_call.1} parent=1 // pred_region
      %s23 = ssub.s32 1024, 1024
      %24 = vsyncadd [#allocation7], %s23
      %s25 = sshll.u32 [#allocation6], 4
      %s26 = int_to_ptr.vmem [resolvable:$true] %s25
      %31 = dma.hbm_to_vmem [thread:$0]  %s1, 1024, %s26, [#allocation7], 64, 64, 4
    $region9: #{tpu_custom_call.1} parent=1 // pred_fallthru
      _
    // Predicated region
    $region10: #{tpu_custom_call.1} parent=1 // pred_check
      _
    $region11: #{tpu_custom_call.1} parent=1 // pred_check_branch
      %33 = sbr.rel (0) target = $region13
    $region12: #{tpu_custom_call.1} parent=1 // pred_region
      %34 = dma.done [#allocation4], 64
    $region13: #{tpu_custom_call.1} parent=1 // pred_fallthru
      _
    // Predicated region
    $region14: #{tpu_custom_call.1} parent=1 // pred_check
      _
    $region15: #{tpu_custom_call.1} parent=1 // pred_check_branch
      %36 = sbr.rel (0) target = $region17
    $region16: #{tpu_custom_call.1} parent=1 // pred_region
      %37 = dma.done [#allocation7], 1024
    $region17: #{tpu_custom_call.1} parent=1 // pred_fallthru
      _
    %p39 = scmp.eq.s32.totalorder 0, 0
    // Predicated region
    $region18: #{tpu_custom_call.1} parent=1 // pred_check
      %p40 = pneg %p39
    $region19: #{tpu_custom_call.1} parent=1 // pred_check_branch
      %42 = sbr.rel (%p40) target = $region21
    $region20: #{tpu_custom_call.1} parent=1 // pred_region
      %43 = vst [vmem:[#allocation2] sm:$0xff] 0.0
    $region21: #{tpu_custom_call.1} parent=1 // pred_fallthru
      _
    %v44 = vld [vmem:[#allocation2] sm:$0xff]
    %v45 = vld [vmem:[#allocation3] sm:$0xf]
    %v46 = vld [vmem:[#allocation6] sm:$0xf]
    %v47 = vld [vmem:[#allocation6 + $0x4] sm:$0xf]
    %v48 = vld [vmem:[#allocation6 + $0x8] sm:$0xf]
    %v49 = vld [vmem:[#allocation6 + $0xc] sm:$0xf]
    %v50 = vld [vmem:[#allocation6 + $0x10] sm:$0xf]
    %v51 = vld [vmem:[#allocation6 + $0x14] sm:$0xf]
    %v52 = vld [vmem:[#allocation6 + $0x18] sm:$0xf]
    %v53 = vld [vmem:[#allocation6 + $0x1c] sm:$0xf]
    %v54 = vld [vmem:[#allocation6 + $0x20] sm:$0xf]
    %v55 = vld [vmem:[#allocation6 + $0x24] sm:$0xf]
    %v56 = vld [vmem:[#allocation6 + $0x28] sm:$0xf]
    %v57 = vld [vmem:[#allocation6 + $0x2c] sm:$0xf]
    %v58 = vld [vmem:[#allocation6 + $0x30] sm:$0xf]
    %v59 = vld [vmem:[#allocation6 + $0x34] sm:$0xf]
    %v60 = vld [vmem:[#allocation6 + $0x38] sm:$0xf]
    %v61 = vld [vmem:[#allocation6 + $0x3c] sm:$0xf]
    %v78 = vunpack.c.l.b16 %v46
    %v79 = vunpack.c.l.b16 %v47
    %v80 = vunpack.c.l.b16 %v48
    %v81 = vunpack.c.l.b16 %v49
    %v82 = vunpack.c.l.b16 %v50
    %v83 = vunpack.c.l.b16 %v51
    %v84 = vunpack.c.l.b16 %v52
    %v85 = vunpack.c.l.b16 %v53
    %v86 = vunpack.c.l.b16 %v54
    %v87 = vunpack.c.l.b16 %v55
    %v88 = vunpack.c.l.b16 %v56
    %v89 = vunpack.c.l.b16 %v57
    %v90 = vunpack.c.l.b16 %v58
    %v91 = vunpack.c.l.b16 %v59
    %v92 = vunpack.c.l.b16 %v60
    %v93 = vunpack.c.l.b16 %v61
    %v94 = vpack.c.b16 %v79, %v78
    %v95 = vpack.c.b16 %v81, %v80
    %v96 = vpack.c.b16 %v83, %v82
    %v97 = vpack.c.b16 %v85, %v84
    %v98 = vpack.c.b16 %v87, %v86
    %v99 = vpack.c.b16 %v89, %v88
    %v100 = vpack.c.b16 %v91, %v90
    %v101 = vpack.c.b16 %v93, %v92
    %110 = vmatprep.subr.bf16.mxu0 0
    %111 = vmatpush1.bf16.msra.mxu0 %v101
    %112 = vmatprep.subr.bf16.mxu0 0
    %113 = vmatpush1.bf16.msra.mxu0 %v100
    %114 = vmatprep.subr.bf16.mxu0 0
    %115 = vmatpush1.bf16.msra.mxu0 %v99
    %116 = vmatprep.subr.bf16.mxu0 0
    %117 = vmatpush1.bf16.msra.mxu0 %v98
    %118 = vmatprep.subr.bf16.mxu0 0
    %119 = vmatpush1.bf16.msra.mxu0 %v97
    %120 = vmatprep.subr.bf16.mxu0 0
    %121 = vmatpush1.bf16.msra.mxu0 %v96
    %122 = vmatprep.subr.bf16.mxu0 0
    %123 = vmatpush1.bf16.msra.mxu0 %v95
    %124 = vmatprep.subr.bf16.mxu0 0
    %125 = vmatpush1.bf16.msra.mxu0 %v94
    %126 = vmatprep.subr.bf16.mxu0 0
    %127 = vmatpush2.bf16.msra.mxu0 0
    %128 = vmatprep.subr.bf16.mxu0 0
    %129 = vmatpush2.bf16.msra.mxu0 0
    %130 = vmatprep.subr.bf16.mxu0 0
    %131 = vmatpush2.bf16.msra.mxu0 0
    %132 = vmatprep.subr.bf16.mxu0 0
    %133 = vmatpush2.bf16.msra.mxu0 0
    %134 = vmatprep.subr.bf16.mxu0 0
    %135 = vmatpush2.bf16.msra.mxu0 0
    %136 = vmatprep.subr.bf16.mxu0 0
    %137 = vmatpush2.bf16.msra.mxu0 0
    %138 = vmatprep.subr.bf16.mxu0 0
    %139 = vmatpush2.bf16.msra.mxu0 0
    %140 = vmatprep.subr.bf16.mxu0 0
    %141 = vmatpush2.bf16.msra.mxu0 0
    %142 = vmatprep.mubr.bf16.mxu0 0
    %143 = vmatmul.mubr.bf16.gmra.mxu0 %v45
    %v144 = vpop.f32.mrf.mxu0
    %v145 = vadd.f32 0.0, %v144
    %v146 = vpop.f32.mrf.mxu0
    %v147 = vpop.f32.mrf.mxu0
    %v148 = vpop.f32.mrf.mxu0
    %149 = vdwg.mxu0
    %v150 = vadd.f32 %v44, %v145
    %151 = vst [vmem:[#allocation2] sm:$0xff] %v150
    // Predicated region
    $region22: #{tpu_custom_call.1} parent=1 // pred_check
      %p152 = pneg %p39
    $region23: #{tpu_custom_call.1} parent=1 // pred_check_branch
      %154 = sbr.rel (%p152) target = $region25
    $region24: #{tpu_custom_call.1} parent=1 // pred_region
      %v155 = vld [vmem:[#allocation2] sm:$0xff]
      %156 = vst [vmem:[#allocation8] sm:$0xff] %v155
    $region25: #{tpu_custom_call.1} parent=1 // pred_fallthru
      _
    // Predicated region
    $region26: #{tpu_custom_call.1} parent=1 // pred_check
      _
    $region27: #{tpu_custom_call.1} parent=1 // pred_check_branch
      %158 = sbr.rel (0) target = $region29
    $region28: #{tpu_custom_call.1} parent=1 // pred_region
      %s160 = ssub.s32 128, 128
      %161 = vsyncadd [#allocation5], %s160
      %s163 = sshll.u32 [#allocation8], 4
      %s164 = int_to_ptr.vmem [resolvable:$true] %s163
      %166 = dma.vmem_to_hbm [thread:$0]  %s164, 128, %s2, [#allocation5]
    $region29: #{tpu_custom_call.1} parent=1 // pred_fallthru
      _
    // Predicated region
    $region30: #{tpu_custom_call.1} parent=1 // pred_check
      _
    $region31: #{tpu_custom_call.1} parent=1 // pred_check_branch
      %168 = sbr.rel (0) target = $region33
    $region32: #{tpu_custom_call.1} parent=1 // pred_region
      %169 = dma.done [#allocation5], 128
    $region33: #{tpu_custom_call.1} parent=1 // pred_fallthru
      _
    %170 = vsyncpa [#allocation4], 1
    %171 = vsyncpa [#allocation7], 1
    %172 = vsyncpa [#allocation5], 1

</llo_original>
